<compile_context>
chip_gen: v7x
topology: tpu7x:2x2x1
jax: 0.10.0
libtpu: 0.0.40
codegen_flags: <defaults>
</compile_context>

<pallas_src>
import jax
import jax.numpy as jnp
import numpy as np
from jax.experimental import pallas as pl
from jax.experimental.pallas import tpu as pltpu

EPS = 1e-20
LANES = 128


def _round_up(x, m):
    return (x + m - 1) // m * m


def _pick_tile(rows, max_tile_rows, min_steps=4):
    """Row tile: <= max_tile_rows, multiple of 8 sublanes (or == full dim for
    tiny arrays), and >= min_steps grid steps when possible (v7x megacore)."""
    if rows <= 8 * min_steps:
        return rows                                   # one full block (legal)
    return min(max_tile_rows, _round_up(-(-rows // min_steps), 8))


def _to_rows(x):
    """Lane-dense (rows, 128) f32 view; pure reshape when no pad/cast needed."""
    n = int(np.prod(x.shape))
    if x.dtype != jnp.float32:
        x = x.astype(jnp.float32)
    flat = x.reshape(-1)
    pad = (-n) % LANES
    if pad:
        flat = jnp.pad(flat, (0, pad))
    return flat.reshape(-1, LANES), n


# ------------------------- Pallas kernels -------------------------

def _cd_update_kernel(wd_ref, d_ref, cd_ref, d1_ref, cd2_ref):
    """cd2 = cd * clamp_max(d1 / (d + eps), 1) ** w_pow_d  (elementwise)."""
    w = wd_ref[0]
    ratio = jnp.minimum(d1_ref[...] / (d_ref[...] + EPS), 1.0)
    # torch.pow semantics: 0 ** w == 0 (w > 0 after softplus); negative -> NaN.
    powed = jnp.where(ratio != 0.0, jnp.exp(w * jnp.log(ratio)), 0.0)
    cd2_ref[...] = cd_ref[...] * powed


def _edge_fuse_kernel(w_ref, e_ref, ce_ref, ce1_ref, ece1_ref):
    """ce1 = ce ** w_row (per-row exponent), ece1 = e * ce1 (elementwise)."""
    w = w_ref[...]                                    # (tile, 1), lane-broadcast
    ce = ce_ref[...]
    ce1 = jnp.where(ce != 0.0, jnp.exp(w * jnp.log(ce)), 0.0)
    ce1_ref[...] = ce1
    ece1_ref[...] = e_ref[...] * ce1


# ------------------------- wrappers -------------------------

def cd_update(d, cd, d1, w_pow_d_vec, *, max_tile_rows=2048):
    """cd2 = cd * clamp_max(d1/(d+eps), 1) ** w_pow_d, lane-dense 1-D grid."""
    orig_shape = d.shape
    d_p, n = _to_rows(d)
    cd_p, _ = _to_rows(cd)
    d1_p, _ = _to_rows(d1)
    rows = d_p.shape[0]
    tile = _pick_tile(rows, max_tile_rows)

    blk = pl.BlockSpec((tile, LANES), lambda i: (i, 0))
    out = pl.pallas_call(
        _cd_update_kernel,
        out_shape=jax.ShapeDtypeStruct((rows, LANES), jnp.float32),
        grid=(pl.cdiv(rows, tile),),
        in_specs=[
            pl.BlockSpec(memory_space=pltpu.MemorySpace.SMEM),  # w_pow_d (1,)
            blk, blk, blk,
        ],
        out_specs=blk,
        compiler_params=pltpu.CompilerParams(
            dimension_semantics=("parallel",)),
    )(w_pow_d_vec, d_p, cd_p, d1_p)

    flat = out.reshape(-1)
    if flat.shape[0] != n:
        flat = flat[:n]
    return flat.reshape(orig_shape)


def edge_fuse(e1, ce, w_pow_e_vec, *, max_tile_rows=2048):
    """ce1 = ce ** w_pow_e[direction], ece1 = e1 * ce1.

    (B, C, K, H, W) is folded into one row axis; the per-direction exponent is
    delivered as a tiny per-row column so one 1-D grid with big blocks covers
    the whole tensor."""
    B, C, K, H, W = e1.shape
    G, n = B * C, H * W
    n_pad = _round_up(n, LANES)
    rows_per = n_pad // LANES             # rows per (b, c, k) slab
    total_rows = G * K * rows_per

    def prep(x):
        if x.dtype != jnp.float32:
            x = x.astype(jnp.float32)
        if n_pad == n:
            return x.reshape(total_rows, LANES)       # pure reshape, no copy
        x = x.reshape(G * K, n)
        x = jnp.pad(x, ((0, 0), (0, n_pad - n)))
        return x.reshape(total_rows, LANES)

    e1_p, ce_p = prep(e1), prep(ce)

    # Per-row exponent map: row r belongs to direction (r // rows_per) % K.
    # total_rows * 4 bytes ~ 0.8% of the data moved — negligible.
    w_rows = jnp.tile(jnp.repeat(w_pow_e_vec.astype(jnp.float32), rows_per), G)
    w_rows = w_rows.reshape(total_rows, 1)

    tile = _pick_tile(total_rows, max_tile_rows)
    blk = pl.BlockSpec((tile, LANES), lambda i: (i, 0))
    wblk = pl.BlockSpec((tile, 1), lambda i: (i, 0))

    ce1_p, ece1_p = pl.pallas_call(
        _edge_fuse_kernel,
        out_shape=(jax.ShapeDtypeStruct((total_rows, LANES), jnp.float32),
                   jax.ShapeDtypeStruct((total_rows, LANES), jnp.float32)),
        grid=(pl.cdiv(total_rows, tile),),
        in_specs=[wblk, blk, blk],
        out_specs=(blk, blk),
        compiler_params=pltpu.CompilerParams(
            dimension_semantics=("parallel",)),
    )(w_rows, e1_p, ce_p)

    def unprep(y):
        if n_pad == n:
            return y.reshape(B, C, K, H, W)
        return y.reshape(G * K, n_pad)[:, :n].reshape(B, C, K, H, W)

    return unprep(ce1_p), unprep(ece1_p)


# ------------------------- glue (plain JAX) -------------------------

def prepare_weights(w_pow_d_raw, w_pow_e_raw):
    """softplus + duplicate direction-1 exponent to the front (3 -> 4 dirs)."""
    w_pow_d = jax.nn.softplus(w_pow_d_raw)                            # (1,1,1,1)
    w_pow_e = jax.nn.softplus(w_pow_e_raw)                            # (1,1,3,1,1)
    w_pow_e = jnp.concatenate((w_pow_e[:, :, 1:2], w_pow_e), axis=2)  # (1,1,4,1,1)
    return w_pow_d, w_pow_e


def _stage_stub(d, cd, ece, ce, bias):
    # TODO(synk): the real inner model (params['inner_model'] loaded via importlib
    # + a .pt checkpoint in PyTorch) is external to SNC2; analytic stand-in.
    d_out = (d * cd + 0.1 * bias) / (cd + 0.5)
    e_out = jnp.tanh(ece + 0.05 * bias)
    ce_out = jax.nn.sigmoid(ce + 0.1 * bias)   # non-negative, like a confidence map
    return {'d': d_out, 'e': e_out, 'ce': ce_out}


@jax.jit
def snc2_forward(d, cd, ece, ce, w_pow_d_raw, w_pow_e_raw):
    w_pow_d, w_pow_e = prepare_weights(w_pow_d_raw, w_pow_e_raw)
    if cd is None:                       # static (trace-time) default, like the module
        cd = (d > 0).astype(jnp.float32)

    # stage 1 (frozen inner model, stand-in)
    outs1 = _stage_stub(d, cd, ece, ce, bias=1.0)

    # --- SNC2 inter-stage fusion: Pallas kernels ---
    wd_vec = w_pow_d.reshape(1).astype(jnp.float32)
    we_vec = w_pow_e.reshape(-1).astype(jnp.float32)     # (4,)
    cd2 = cd_update(d, cd, outs1['d'], wd_vec)
    ce1, ece1 = edge_fuse(outs1['e'], outs1['ce'], we_vec)

    # stage 2 (inner model, stand-in)
    outs2 = _stage_stub(d, cd2, ece1, ce1, bias=2.0)
    return outs2, (cd2, ce1, ece1)


# ------------------------- reference for checking -------------------------

def _fusion_reference(d, cd, d1, e1, ce, w_pow_d, w_pow_e):
    cd2 = cd * jnp.power(jnp.minimum(d1 / (d + EPS), 1.0), w_pow_d)
    ce1 = jnp.power(ce, w_pow_e)
    return cd2, ce1, e1 * ce1


if __name__ == "__main__":
    B, C, K, H, W = 2, 1, 4, 16, 16
    key = jax.random.PRNGKey(0)
    k1, k2, k3, k4, k5 = jax.random.split(key, 5)

    # sparse depth map with zeros (unobserved pixels)
    d = jnp.maximum(jax.random.normal(k1, (B, C, H, W), jnp.float32), 0.0)
    cd = (d > 0).astype(jnp.float32)
    ece = jax.random.uniform(k2, (B, C, K, H, W), jnp.float32)
    ce = jax.random.uniform(k3, (B, C, K, H, W), jnp.float32)

    # parameters: torch.rand init, done deterministically here
    w_pow_d_raw = jax.random.uniform(k4, (1, 1, 1, 1), jnp.float32)
    w_pow_e_raw = jax.random.uniform(k5, (1, 1, 3, 1, 1), jnp.float32)

    outs2, (cd2, ce1, ece1) = snc2_forward(d, cd, ece, ce, w_pow_d_raw, w_pow_e_raw)
    jax.block_until_ready(outs2['d'])

    # verify Pallas fusion against a pure-JAX reference
    w_pow_d, w_pow_e = prepare_weights(w_pow_d_raw, w_pow_e_raw)
    outs1 = _stage_stub(d, cd, ece, ce, bias=1.0)
    cd2_ref, ce1_ref, ece1_ref = _fusion_reference(
        d, cd, outs1['d'], outs1['e'], outs1['ce'], w_pow_d, w_pow_e)
    np.testing.assert_allclose(np.asarray(cd2), np.asarray(cd2_ref), rtol=1e-5, atol=1e-5)
    np.testing.assert_allclose(np.asarray(ce1), np.asarray(ce1_ref), rtol=1e-5, atol=1e-5)
    np.testing.assert_allclose(np.asarray(ece1), np.asarray(ece1_ref), rtol=1e-5, atol=1e-5)

    print("KERNEL_OK")
</pallas_src>

<mosaic_0001>
module attributes {stable_mosaic.version = 11 : i64} {
  func.func @_edge_fuse_kernel(%arg0: i32, %arg1: memref<16x1xf32, #tpu.memory_space<vmem>>, %arg2: memref<16x128xf32, #tpu.memory_space<vmem>>, %arg3: memref<16x128xf32, #tpu.memory_space<vmem>>, %arg4: memref<16x128xf32, #tpu.memory_space<vmem>>, %arg5: memref<16x128xf32, #tpu.memory_space<vmem>>) attributes {dimension_semantics = [#tpu.dimension_semantics<parallel>], iteration_bounds = array<i64: 1>, scalar_prefetch = 0 : i64, scratch_operands = 0 : i64, tpu.core_type = #tpu.core_type<tc>, window_params = [{transform_indices = @transform_0, window_bounds = array<i64: 16, 1>}, {transform_indices = @transform_1, window_bounds = array<i64: 16, 128>}, {transform_indices = @transform_2, window_bounds = array<i64: 16, 128>}, {transform_indices = @transform_3, window_bounds = array<i64: 16, 128>}, {transform_indices = @transform_4, window_bounds = array<i64: 16, 128>}]} {
    %c0 = arith.constant 0 : index
    %c0_0 = arith.constant 0 : index
    %0 = vector.load %arg1[%c0, %c0_0] : memref<16x1xf32, #tpu.memory_space<vmem>>, vector<16x1xf32>
    %c0_1 = arith.constant 0 : index
    %c0_2 = arith.constant 0 : index
    %1 = vector.load %arg3[%c0_1, %c0_2] : memref<16x128xf32, #tpu.memory_space<vmem>>, vector<16x128xf32>
    %cst = arith.constant 0.000000e+00 : f32
    %2 = vector.broadcast %cst : f32 to vector<16x128xf32>
    %3 = arith.cmpf one, %1, %2 : vector<16x128xf32>
    %4 = math.log %1 : vector<16x128xf32>
    %5 = vector.broadcast %0 : vector<16x1xf32> to vector<16x128xf32>
    %6 = arith.mulf %5, %4 : vector<16x128xf32>
    %7 = math.exp %6 : vector<16x128xf32>
    %cst_3 = arith.constant 0.000000e+00 : f32
    %8 = vector.broadcast %cst_3 : f32 to vector<16x128xf32>
    %9 = arith.select %3, %7, %8 : vector<16x128xi1>, vector<16x128xf32>
    %c0_4 = arith.constant 0 : index
    %c0_5 = arith.constant 0 : index
    %10 = vector.load %arg4[%c0_4, %c0_5] : memref<16x128xf32, #tpu.memory_space<vmem>>, vector<16x128xf32>
    tpu.vector_store %arg4[%c0_4, %c0_5], %9 {strides = array<i32>} : memref<16x128xf32, #tpu.memory_space<vmem>>, vector<16x128xf32>,
    %c0_6 = arith.constant 0 : index
    %c0_7 = arith.constant 0 : index
    %11 = vector.load %arg2[%c0_6, %c0_7] : memref<16x128xf32, #tpu.memory_space<vmem>>, vector<16x128xf32>
    %12 = arith.mulf %11, %9 : vector<16x128xf32>
    %c0_8 = arith.constant 0 : index
    %c0_9 = arith.constant 0 : index
    %13 = vector.load %arg5[%c0_8, %c0_9] : memref<16x128xf32, #tpu.memory_space<vmem>>, vector<16x128xf32>
    tpu.vector_store %arg5[%c0_8, %c0_9], %12 {strides = array<i32>} : memref<16x128xf32, #tpu.memory_space<vmem>>, vector<16x128xf32>,
    return
  }
  func.func @transform_0(%arg0: i32) -> (i32, i32) {
    %c0_i32 = arith.constant 0 : i32
    %c0_i32_0 = arith.constant 0 : i32
    return %arg0, %c0_i32 : i32, i32
  }
  func.func @transform_1(%arg0: i32) -> (i32, i32) {
    %c0_i32 = arith.constant 0 : i32
    %c0_i32_0 = arith.constant 0 : i32
    return %arg0, %c0_i32 : i32, i32
  }
  func.func @transform_2(%arg0: i32) -> (i32, i32) {
    %c0_i32 = arith.constant 0 : i32
    %c0_i32_0 = arith.constant 0 : i32
    return %arg0, %c0_i32 : i32, i32
  }
  func.func @transform_3(%arg0: i32) -> (i32, i32) {
    %c0_i32 = arith.constant 0 : i32
    %c0_i32_0 = arith.constant 0 : i32
    return %arg0, %c0_i32 : i32, i32
  }
  func.func @transform_4(%arg0: i32) -> (i32, i32) {
    %c0_i32 = arith.constant 0 : i32
    %c0_i32_0 = arith.constant 0 : i32
    return %arg0, %c0_i32 : i32, i32
  }
}

module attributes {stable_mosaic.version = 11 : i64} {
  func.func @_cd_update_kernel(%arg0: i32, %arg1: memref<1xf32, #tpu.memory_space<smem>>, %arg2: memref<4x128xf32, #tpu.memory_space<vmem>>, %arg3: memref<4x128xf32, #tpu.memory_space<vmem>>, %arg4: memref<4x128xf32, #tpu.memory_space<vmem>>, %arg5: memref<4x128xf32, #tpu.memory_space<vmem>>) attributes {dimension_semantics = [#tpu.dimension_semantics<parallel>], iteration_bounds = array<i64: 1>, scalar_prefetch = 0 : i64, scratch_operands = 0 : i64, tpu.core_type = #tpu.core_type<tc>, window_params = [{transform_indices = @transform_0, window_bounds = array<i64: 1>}, {transform_indices = @transform_1, window_bounds = array<i64: 4, 128>}, {transform_indices = @transform_2, window_bounds = array<i64: 4, 128>}, {transform_indices = @transform_3, window_bounds = array<i64: 4, 128>}, {transform_indices = @transform_4, window_bounds = array<i64: 4, 128>}]} {
    %c0 = arith.constant 0 : index
    %0 = memref.load %arg1[%c0] : memref<1xf32, #tpu.memory_space<smem>>
    %c0_0 = arith.constant 0 : index
    %c0_1 = arith.constant 0 : index
    %1 = vector.load %arg4[%c0_0, %c0_1] : memref<4x128xf32, #tpu.memory_space<vmem>>, vector<4x128xf32>
    %c0_2 = arith.constant 0 : index
    %c0_3 = arith.constant 0 : index
    %2 = vector.load %arg2[%c0_2, %c0_3] : memref<4x128xf32, #tpu.memory_space<vmem>>, vector<4x128xf32>
    %cst = arith.constant 9.99999968E-21 : f32
    %3 = vector.broadcast %cst : f32 to vector<4x128xf32>
    %4 = arith.addf %2, %3 : vector<4x128xf32>
    %5 = arith.divf %1, %4 : vector<4x128xf32>
    %cst_4 = arith.constant 1.000000e+00 : f32
    %6 = vector.broadcast %cst_4 : f32 to vector<4x128xf32>
    %7 = arith.minimumf %5, %6 : vector<4x128xf32>
    %cst_5 = arith.constant 0.000000e+00 : f32
    %8 = vector.broadcast %cst_5 : f32 to vector<4x128xf32>
    %9 = arith.cmpf one, %7, %8 : vector<4x128xf32>
    %10 = math.log %7 : vector<4x128xf32>
    %11 = vector.broadcast %0 : f32 to vector<4x128xf32>
    %12 = arith.mulf %11, %10 : vector<4x128xf32>
    %13 = math.exp %12 : vector<4x128xf32>
    %cst_6 = arith.constant 0.000000e+00 : f32
    %14 = vector.broadcast %cst_6 : f32 to vector<4x128xf32>
    %15 = arith.select %9, %13, %14 : vector<4x128xi1>, vector<4x128xf32>
    %c0_7 = arith.constant 0 : index
    %c0_8 = arith.constant 0 : index
    %16 = vector.load %arg3[%c0_7, %c0_8] : memref<4x128xf32, #tpu.memory_space<vmem>>, vector<4x128xf32>
    %17 = arith.mulf %16, %15 : vector<4x128xf32>
    %c0_9 = arith.constant 0 : index
    %c0_10 = arith.constant 0 : index
    %18 = vector.load %arg5[%c0_9, %c0_10] : memref<4x128xf32, #tpu.memory_space<vmem>>, vector<4x128xf32>
    tpu.vector_store %arg5[%c0_9, %c0_10], %17 {strides = array<i32>} : memref<4x128xf32, #tpu.memory_space<vmem>>, vector<4x128xf32>,
    return
  }
  func.func @transform_0(%arg0: i32) -> i32 {
    %c0_i32 = arith.constant 0 : i32
    %c0_i32_0 = arith.constant 0 : i32
    return %c0_i32 : i32
  }
  func.func @transform_1(%arg0: i32) -> (i32, i32) {
    %c0_i32 = arith.constant 0 : i32
    %c0_i32_0 = arith.constant 0 : i32
    return %arg0, %c0_i32 : i32, i32
  }
  func.func @transform_2(%arg0: i32) -> (i32, i32) {
    %c0_i32 = arith.constant 0 : i32
    %c0_i32_0 = arith.constant 0 : i32
    return %arg0, %c0_i32 : i32, i32
  }
  func.func @transform_3(%arg0: i32) -> (i32, i32) {
    %c0_i32 = arith.constant 0 : i32
    %c0_i32_0 = arith.constant 0 : i32
    return %arg0, %c0_i32 : i32, i32
  }
  func.func @transform_4(%arg0: i32) -> (i32, i32) {
    %c0_i32 = arith.constant 0 : i32
    %c0_i32_0 = arith.constant 0 : i32
    return %arg0, %c0_i32 : i32, i32
  }
}

</mosaic_0001>

<llo_original>
// kernel: tile.6
$region0: #{tile.6}
  #allocation0 [shape = 's32[1]{0}', space=sflag, size = 0x4, scoped, tag = 'scoped memory for tile.6']
  %s0 = inlined_call_operand.vmem [shape: f32[8], index: 0, kind: input, shape index: {}]
  %s1 = inlined_call_operand.vmem [shape: f32[2,8], index: 1, kind: output, shape index: {}]
  // Predicated region
  $region2: #{tile.6} parent=0 // pred_check
    _
  $region3: #{tile.6} parent=0 // pred_check_branch
    %3 = sbr.rel (0) target = $region5
  $region4: #{tile.6} parent=0 // pred_region
    _
  $region5: #{tile.6} parent=0 // pred_fallthru
    _
  %v4 = vld [vmem:[%s0] ss:$0 sm:$0xff]
  %5 = vst [vmem:[%s1] sm:$0x3] %v4

// kernel: tile.5
$region0: #{tile.5}
  %s0 = inlined_call_operand.vmem [shape: f32[4,2], index: 0, kind: input, shape index: {}]
  %s1 = inlined_call_operand.vmem [shape: f32[8], index: 1, kind: output, shape index: {}]
  $region1: #{tile.5} parent=0
    #allocation0 [shape = 'u8[4096]{0}', space=vmem, size = 0x1000, scoped, tag = 'scoped mem for output reshape']
    #allocation1 [shape = 'u8[4096]{0}', space=vmem, size = 0x1000, scoped, tag = 'scoped mem for input reshape']
    %s3 = sshllo.u32 0, 4
    %v4 = vld [vmem:[%s0] sm:%s3]
    %5 = vst [vmem:[#allocation1] sm:%s3] %v4
    %v6 = vld [vmem:[#allocation1] sm:$0x1]
    %vm7 = vcmask 15360
    %8 = vst.msk [vmem:[#allocation0] sm:$0x1] %vm7, %v6
    %s9 = scalar_lea.vmem [#allocation1], 3
    %v10 = vld [vmem:[%s9] sm:$0x1]
    %11 = vrot.lane.b32.xlu0 %v10, 6
    %v12 = vpop.permute.xlu0 %11
    %vm13 = vcmask 64560
    %14 = vst.msk [vmem:[#allocation0] sm:$0x1] %vm13, %v12
    %s15 = scalar_lea.vmem [#allocation1], 2
    %v16 = vld [vmem:[%s15] sm:$0x1]
    %17 = vrot.lane.b32.xlu0 %v16, 4
    %v18 = vpop.permute.xlu0 %17
    %vm19 = vcmask 48160
    %20 = vst.msk [vmem:[#allocation0] sm:$0x1] %vm19, %v18
    %s21 = scalar_lea.vmem [#allocation1], 1
    %v22 = vld [vmem:[%s21] sm:$0x1]
    %23 = vrot.lane.b32.xlu0 %v22, 2
    %v24 = vpop.permute.xlu0 %23
    %vm25 = vcmask 31760
    %26 = vst.msk [vmem:[#allocation0] sm:$0x1] %vm25, %v24
    %s28 = sshllo.u32 0, 1
    %v30 = vld [vmem:[#allocation0] sm:%s28]
    %s31 = sshllo.u32 0, 1
    %32 = vst [vmem:[%s1] sm:%s31] %v30

// kernel: tile.0
$region0: #{tile.0}
  %s0 = inlined_call_operand.vmem [shape: f32[2,8], index: 0, kind: input, shape index: {}]
  %s1 = inlined_call_operand.vmem [shape: f32[16,1], index: 1, kind: output, shape index: {}]
  $region1: #{tile.0} parent=0
    #allocation0 [shape = 'u8[4096]{0}', space=vmem, size = 0x1000, scoped, tag = 'scoped mem for input reshape']
    %s3 = sshllo.u32 0, 2
    %v4 = vld [vmem:[%s0] sm:%s3]
    %5 = vst [vmem:[#allocation0] sm:%s3] %v4
    %v6 = vld [vmem:[#allocation0] sm:$0x3]
    %vm7 = vcmask 7168
    %8 = vst.msk [vmem:[%s1] ss:$8 sm:$0x3] %vm7, %v6
    %v9 = vld [vmem:[#allocation0] sm:$0x3]
    %10 = vrot.lane.b32.xlu0 %v9, 127
    %v11 = vpop.permute.xlu0 %10
    %vm12 = vcmask 7168
    %s13 = scalar_lea.vmem %s1, 1
    %14 = vst.msk [vmem:[%s13] ss:$8 sm:$0x3] %vm12, %v11
    %v15 = vld [vmem:[#allocation0] sm:$0x3]
    %16 = vrot.lane.b32.xlu0 %v15, 126
    %v17 = vpop.permute.xlu0 %16
    %vm18 = vcmask 7168
    %s19 = scalar_lea.vmem %s1, 2
    %20 = vst.msk [vmem:[%s19] ss:$8 sm:$0x3] %vm18, %v17
    %v21 = vld [vmem:[#allocation0] sm:$0x3]
    %22 = vrot.lane.b32.xlu0 %v21, 125
    %v23 = vpop.permute.xlu0 %22
    %vm24 = vcmask 7168
    %s25 = scalar_lea.vmem %s1, 3
    %26 = vst.msk [vmem:[%s25] ss:$8 sm:$0x3] %vm24, %v23
    %v27 = vld [vmem:[#allocation0] sm:$0x3]
    %28 = vrot.lane.b32.xlu0 %v27, 124
    %v29 = vpop.permute.xlu0 %28
    %vm30 = vcmask 7168
    %s31 = scalar_lea.vmem %s1, 4
    %32 = vst.msk [vmem:[%s31] ss:$8 sm:$0x3] %vm30, %v29
    %v33 = vld [vmem:[#allocation0] sm:$0x3]
    %34 = vrot.lane.b32.xlu0 %v33, 123
    %v35 = vpop.permute.xlu0 %34
    %vm36 = vcmask 7168
    %s37 = scalar_lea.vmem %s1, 5
    %38 = vst.msk [vmem:[%s37] ss:$8 sm:$0x3] %vm36, %v35
    %v39 = vld [vmem:[#allocation0] sm:$0x3]
    %40 = vrot.lane.b32.xlu0 %v39, 122
    %v41 = vpop.permute.xlu0 %40
    %vm42 = vcmask 7168
    %s43 = scalar_lea.vmem %s1, 6
    %44 = vst.msk [vmem:[%s43] ss:$8 sm:$0x3] %vm42, %v41
    %v45 = vld [vmem:[#allocation0] sm:$0x3]
    %46 = vrot.lane.b32.xlu0 %v45, 121
    %v47 = vpop.permute.xlu0 %46
    %vm48 = vcmask 7168
    %s49 = scalar_lea.vmem %s1, 7
    %50 = vst.msk [vmem:[%s49] ss:$8 sm:$0x3] %vm48, %v47

// kernel: snc2_forward.2
$region0: #{snc2_forward.2}
  #allocation0 [shape = 'u32[]', space=smem, size = 0x4, offset = 0x4, fixed_abs, tag = 'smem constant byte address 0x4 - core index']
  #allocation1 [shape = 'u32[144,128]{1,0:T(1,128)}', space=vmem, size = 0x12000, scoped, tag = 'internal scratch']
  #allocation2 [shape = 'f32[1]{0:T(128)S(6)}', space=smem, size = 0x200, scoped, tag = 'scoped memory for snc2_forward.2']
  %s0 = inlined_call_operand.<no memory space> [shape: f32[1], index: 0, kind: input, shape index: {}]
  %s1 = inlined_call_operand.vmem [shape: f32[4,128], index: 1, kind: input, shape index: {}]
  %s2 = inlined_call_operand.vmem [shape: f32[4,128], index: 2, kind: input, shape index: {}]
  %s3 = inlined_call_operand.vmem [shape: f32[4,128], index: 3, kind: input, shape index: {}]
  %s4 = inlined_call_operand.vmem [shape: f32[4,128], index: 4, kind: output, shape index: {}]
  %s5 = sld [smem:[#allocation0]]
  $region26: #{snc2_forward.2} parent=0
    _
  %s7 = ssub.s32 1, %s5
  %s8 = scalar_select 0, %s7, %s5
  %9 = sst [smem:[#allocation2]] %s0
  // Predicated region
  $region2: #{snc2_forward.2} parent=0 // pred_check
    _
  $region3: #{snc2_forward.2} parent=0 // pred_check_branch
    %11 = sbr.rel (0) target = $region5
  $region4: #{snc2_forward.2} parent=0 // pred_region
    _
  $region5: #{snc2_forward.2} parent=0 // pred_fallthru
    _
  // Predicated region
  $region6: #{snc2_forward.2} parent=0 // pred_check
    _
  $region7: #{snc2_forward.2} parent=0 // pred_check_branch
    %13 = sbr.rel (0) target = $region9
  $region8: #{snc2_forward.2} parent=0 // pred_region
    _
  $region9: #{snc2_forward.2} parent=0 // pred_fallthru
    _
  // Predicated region
  $region10: #{snc2_forward.2} parent=0 // pred_check
    _
  $region11: #{snc2_forward.2} parent=0 // pred_check_branch
    %15 = sbr.rel (0) target = $region13
  $region12: #{snc2_forward.2} parent=0 // pred_region
    _
  $region13: #{snc2_forward.2} parent=0 // pred_fallthru
    _
  // Predicated region
  $region14: #{snc2_forward.2} parent=0 // pred_check
    _
  $region15: #{snc2_forward.2} parent=0 // pred_check_branch
    %17 = sbr.rel (0) target = $region17
  $region16: #{snc2_forward.2} parent=0 // pred_region
    _
  $region17: #{snc2_forward.2} parent=0 // pred_fallthru
    _
  %s18 = sld [smem:[#allocation2]]
  %v19 = vld [vmem:[%s3] sm:$0xf]
  %v20 = vld [vmem:[%s1] sm:$0xf]
  %v21 = vadd.f32 %v20, 1e-20
  %v22 = vrcp.pop %v21
  %v23 = vmul.f32 %v19, %v22
  %v24 = vmin.f32 %v23, 1.0
  %vm25 = vcmp.ne.f32.partialorder %v24, 0.0
  %v26 = vlog2.pop %v24
  %v27 = vmul.f32 %v26, 0.6931472
  %v28 = vstv %s18
  %v29 = vmul.f32 %v28, %v27
  %v30 = vmul.f32 %v29, 1.442695
  %v31 = vpow.pop %v30
  %v32 = vsel %vm25, %v31, 0.0
  %v33 = vld [vmem:[%s2] sm:$0xf]
  %v34 = vmul.f32 %v33, %v32
  %35 = vst [vmem:[%s4] sm:$0xf] %v34
  // Predicated region
  $region18: #{snc2_forward.2} parent=0 // pred_check
    _
  $region19: #{snc2_forward.2} parent=0 // pred_check_branch
    %37 = sbr.rel (0) target = $region21
  $region20: #{snc2_forward.2} parent=0 // pred_region
    _
  $region21: #{snc2_forward.2} parent=0 // pred_fallthru
    _
  // Predicated region
  $region22: #{snc2_forward.2} parent=0 // pred_check
    _
  $region23: #{snc2_forward.2} parent=0 // pred_check_branch
    %39 = sbr.rel (0) target = $region25
  $region24: #{snc2_forward.2} parent=0 // pred_region
    _
  $region25: #{snc2_forward.2} parent=0 // pred_fallthru
    _

// kernel: snc2_forward.3
$region0: #{snc2_forward.3}
  #allocation0 [shape = 'u32[]', space=smem, size = 0x4, offset = 0x4, fixed_abs, tag = 'smem constant byte address 0x4 - core index']
  #allocation1 [shape = 'u32[144,128]{1,0:T(1,128)}', space=vmem, size = 0x12000, scoped, tag = 'internal scratch']
  %s0 = inlined_call_operand.vmem [shape: f32[16,1], index: 0, kind: input, shape index: {}]
  %s1 = inlined_call_operand.vmem [shape: f32[16,128], index: 1, kind: input, shape index: {}]
  %s2 = inlined_call_operand.vmem [shape: f32[16,128], index: 2, kind: input, shape index: {}]
  %s3 = inlined_call_operand.vmem [shape: f32[16,128], index: 3, kind: output, shape index: {0}]
  %s4 = inlined_call_operand.vmem [shape: f32[16,128], index: 4, kind: output, shape index: {1}]
  %5 = xla_tuple %s3, %s4
  %s6 = sld [smem:[#allocation0]]
  $region30: #{snc2_forward.3} parent=0
    _
  %s8 = ssub.s32 1, %s6
  %s9 = scalar_select 0, %s8, %s6
  // Predicated region
  $region2: #{snc2_forward.3} parent=0 // pred_check
    _
  $region3: #{snc2_forward.3} parent=0 // pred_check_branch
    %11 = sbr.rel (0) target = $region5
  $region4: #{snc2_forward.3} parent=0 // pred_region
    _
  $region5: #{snc2_forward.3} parent=0 // pred_fallthru
    _
  // Predicated region
  $region6: #{snc2_forward.3} parent=0 // pred_check
    _
  $region7: #{snc2_forward.3} parent=0 // pred_check_branch
    %13 = sbr.rel (0) target = $region9
  $region8: #{snc2_forward.3} parent=0 // pred_region
    _
  $region9: #{snc2_forward.3} parent=0 // pred_fallthru
    _
  // Predicated region
  $region10: #{snc2_forward.3} parent=0 // pred_check
    _
  $region11: #{snc2_forward.3} parent=0 // pred_check_branch
    %15 = sbr.rel (0) target = $region13
  $region12: #{snc2_forward.3} parent=0 // pred_region
    _
  $region13: #{snc2_forward.3} parent=0 // pred_fallthru
    _
  %v16 = vld [vmem:[%s0] sm:$0xff]
  %v17 = vld [vmem:[%s0 + $0x8] sm:$0xff]
  %v18 = vld [vmem:[%s2] sm:$0xff]
  %v19 = vld [vmem:[%s2 + $0x8] sm:$0xff]
  %vm20 = vcmp.ne.f32.partialorder %v18, 0.0
  %vm21 = vcmp.ne.f32.partialorder %v19, 0.0
  %v22 = vlog2.pop %v18
  %v23 = vmul.f32 %v22, 0.6931472
  %v24 = vlog2.pop %v19
  %v25 = vmul.f32 %v24, 0.6931472
  %27 = vset.pattern.permute.xlu0 0
  %28 = vperm.xlu0 %27, %v16
  %v29 = vpop.permute.xlu0 %28
  %32 = vset.pattern.permute.xlu0 0
  %33 = vperm.xlu0 %32, %v17
  %v34 = vpop.permute.xlu0 %33
  %v36 = vmul.f32 %v29, %v23
  %v37 = vmul.f32 %v34, %v25
  %v38 = vmul.f32 %v36, 1.442695
  %v39 = vpow.pop %v38
  %v40 = vmul.f32 %v37, 1.442695
  %v41 = vpow.pop %v40
  %v42 = vsel %vm20, %v39, 0.0
  %v43 = vsel %vm21, %v41, 0.0
  %44 = vst [vmem:[%s3] sm:$0xff] %v42
  %45 = vst [vmem:[%s3 + $0x8] sm:$0xff] %v43
  %v46 = vld [vmem:[%s1] sm:$0xff]
  %v47 = vld [vmem:[%s1 + $0x8] sm:$0xff]
  %v48 = vmul.f32 %v46, %v42
  %v49 = vmul.f32 %v47, %v43
  %50 = vst [vmem:[%s4] sm:$0xff] %v48
  %51 = vst [vmem:[%s4 + $0x8] sm:$0xff] %v49
  // Predicated region
  $region14: #{snc2_forward.3} parent=0 // pred_check
    _
  $region15: #{snc2_forward.3} parent=0 // pred_check_branch
    %53 = sbr.rel (0) target = $region17
  $region16: #{snc2_forward.3} parent=0 // pred_region
    _
  $region17: #{snc2_forward.3} parent=0 // pred_fallthru
    _
  // Predicated region
  $region18: #{snc2_forward.3} parent=0 // pred_check
    _
  $region19: #{snc2_forward.3} parent=0 // pred_check_branch
    %55 = sbr.rel (0) target = $region21
  $region20: #{snc2_forward.3} parent=0 // pred_region
    _
  $region21: #{snc2_forward.3} parent=0 // pred_fallthru
    _
  // Predicated region
  $region22: #{snc2_forward.3} parent=0 // pred_check
    _
  $region23: #{snc2_forward.3} parent=0 // pred_check_branch
    %57 = sbr.rel (0) target = $region25
  $region24: #{snc2_forward.3} parent=0 // pred_region
    _
  $region25: #{snc2_forward.3} parent=0 // pred_fallthru
    _
  // Predicated region
  $region26: #{snc2_forward.3} parent=0 // pred_check
    _
  $region27: #{snc2_forward.3} parent=0 // pred_check_branch
    %59 = sbr.rel (0) target = $region29
  $region28: #{snc2_forward.3} parent=0 // pred_region
    _
  $region29: #{snc2_forward.3} parent=0 // pred_fallthru
    _

</llo_original>
